<compile_context>
chip_gen: v5e
topology: v5e:2x2
jax: 0.10.0
libtpu: 0.0.40
codegen_flags: <defaults>
</compile_context>

<pallas_src>
import functools

import jax
import jax.numpy as jnp
from jax.experimental import pallas as pl
from jax.experimental.pallas import tpu as pltpu

EPS = 1e-5
LANE = 128
SUBLANE = 8

_VMEM_LIMIT = 48 * 1024 * 1024          # under v7x's 64 MiB physical VMEM; fine on v5e/v6e
_FUSED_VMEM_BUDGET = 24 * 1024 * 1024   # 2x(in)+2x(out) double-buffered full-batch strips


def _round_up(x, m):
    return (x + m - 1) // m * m


def _choose_tile_c(c):
    """Channel (lane) tile.

    Full extent when small (legal for any C, including C not a multiple of 128);
    otherwise wide 128-multiples.  A ragged last channel block is safe: Pallas drops
    out-of-bounds writes and all math is lane-local.
    """
    if c % LANE != 0:
        return c if c <= 2048 else 1024
    if c <= 1024:
        half = c // 2
        if half >= 512 and half % LANE == 0:
            return half          # two lane-dense tiles keep both v7x TensorCores busy
        return c
    for t in (1024, 768, 512):
        if c % t == 0:
            return t
    return 1024


def _choose_tile_n(n, tc, itemsize):
    """Batch (sublane) tile for streaming kernels: ~2-4 MiB blocks, multiple of 8."""
    target = max(SUBLANE, (4 * 1024 * 1024) // max(1, tc * itemsize))
    tn = min(1024, target, _round_up(n, SUBLANE))
    return max(SUBLANE, (tn // SUBLANE) * SUBLANE)


def _colsum(x):
    """Per-channel column sum; bulk of the reduction as VALU vreg adds, one final
    O(C) cross-sublane (XLU) reduce."""
    n = x.shape[0]
    if n % SUBLANE == 0 and n > SUBLANE:
        x = jnp.sum(x.reshape(n // SUBLANE, SUBLANE, x.shape[1]), axis=0)
    return jnp.sum(x, axis=0, keepdims=True)


# ---------------------------------------------------------------------------
# Kernels
# ---------------------------------------------------------------------------
def _bn_train_fused_kernel(x_ref, gain_ref, bias_ref, rmean_ref, rstd_ref,
                           out_ref, nrmean_ref, nrstd_ref):
    """grid = (channel_tiles,).  Whole batch for this channel strip is resident:
    stats + normalize fused -> X read once, written once."""
    n = x_ref.shape[0]
    x = x_ref[...].astype(jnp.float32)
    mean = _colsum(x) * (1.0 / n)
    d = x - mean
    # centered (two-pass) variance: no E[x^2]-E[x]^2 cancellation; unbiased (ddof=1)
    var = _colsum(d * d) * (1.0 / max(n - 1, 1))
    std = jnp.sqrt(var)
    scale = gain_ref[...] * pl.reciprocal(std + EPS, approx=False)
    out_ref[...] = (d * scale + bias_ref[...]).astype(out_ref.dtype)
    nrmean_ref[...] = 0.99 * rmean_ref[...] + 0.01 * mean
    nrstd_ref[...] = 0.99 * rstd_ref[...] + 0.01 * std


def _bn_train_stats_kernel(n_true, tn, mask_tail,
                           x_ref, gain_ref, bias_ref, rmean_ref, rstd_ref,
                           nrmean_ref, nrstd_ref, scale_ref, shift_ref,
                           sum_acc, sq_acc):
    """Fallback pass 1.  grid = (channel_tiles, batch_tiles); batch axis is the
    reduction ("arbitrary").  n_true/tn/mask_tail are static (X's shape already
    forces a retrace per batch size, so SMEM prefetch would buy nothing here)."""
    i = pl.program_id(1)

    @pl.when(i == 0)
    def _init():
        sum_acc[...] = jnp.zeros_like(sum_acc)
        sq_acc[...] = jnp.zeros_like(sq_acc)

    x = x_ref[...].astype(jnp.float32)
    if mask_tail:
        # Last batch tile is ragged; out-of-bounds rows hold undefined data.
        row = i * tn + jax.lax.broadcasted_iota(jnp.int32, x.shape, 0)
        x = jnp.where(row < n_true, x, 0.0)
    x3 = x.reshape(tn // SUBLANE, SUBLANE, x.shape[1])
    sum_acc[...] += jnp.sum(x3, axis=0)        # VALU vreg adds into (8, tc) scratch
    sq_acc[...] += jnp.sum(x3 * x3, axis=0)

    @pl.when(i == pl.num_programs(1) - 1)
    def _finalize():
        s = jnp.sum(sum_acc[...], axis=0, keepdims=True)    # O(C) XLU reduce
        sq = jnp.sum(sq_acc[...], axis=0, keepdims=True)
        mean = s * (1.0 / n_true)
        # TODO(synk): fallback still uses E[x^2]-E[x]^2 (clamped); fused path uses
        # the centered variance. A Chan-style merge would fix it for huge N too.
        var = jnp.maximum((sq - n_true * mean * mean) * (1.0 / max(n_true - 1, 1)), 0.0)
        std = jnp.sqrt(var)
        scale = gain_ref[...] * pl.reciprocal(std + EPS, approx=False)
        scale_ref[...] = scale
        shift_ref[...] = bias_ref[...] - mean * scale
        nrmean_ref[...] = 0.99 * rmean_ref[...] + 0.01 * mean
        nrstd_ref[...] = 0.99 * rstd_ref[...] + 0.01 * std


def _bn_apply_kernel(x_ref, scale_ref, shift_ref, out_ref):
    """Pure streaming elementwise pass: one FMA per element."""
    out_ref[...] = (x_ref[...].astype(jnp.float32) * scale_ref[...]
                    + shift_ref[...]).astype(out_ref.dtype)


# ---------------------------------------------------------------------------
# Wrapper
# ---------------------------------------------------------------------------
def _apply(x, scale, shift, tn, tc):
    n, c = x.shape
    return pl.pallas_call(
        _bn_apply_kernel,
        out_shape=jax.ShapeDtypeStruct((n, c), x.dtype),
        grid=(pl.cdiv(n, tn), pl.cdiv(c, tc)),
        in_specs=[pl.BlockSpec((tn, tc), lambda i, j: (i, j)),
                  pl.BlockSpec((1, tc), lambda i, j: (0, j)),
                  pl.BlockSpec((1, tc), lambda i, j: (0, j))],
        out_specs=pl.BlockSpec((tn, tc), lambda i, j: (i, j)),
        compiler_params=pltpu.CompilerParams(
            dimension_semantics=("parallel", "parallel"),
            vmem_limit_bytes=_VMEM_LIMIT),
    )(x, scale, shift)


def batchnorm_forward(x, gain, bias, running_mean, running_std, train=True,
                      force_two_pass=False):
    """x: [N, C]; gain/bias/running_*: [C].  Returns (out, new_rmean, new_rstd)."""
    n, c = x.shape
    itemsize = max(jnp.dtype(x.dtype).itemsize, 4)
    tc = _choose_tile_c(c)
    nct = pl.cdiv(c, tc)

    gain2 = gain.reshape(1, c)
    bias2 = bias.reshape(1, c)
    rmean2 = running_mean.reshape(1, c)
    rstd2 = running_std.reshape(1, c)
    row_shape = jax.ShapeDtypeStruct((1, c), jnp.float32)

    if train:
        # Fused single pass (1 read + 1 write of X) when the double-buffered
        # full-batch strips (in + out) fit the VMEM budget.
        strip_bytes = n * tc * itemsize
        if (not force_two_pass) and (4 * strip_bytes <= _FUSED_VMEM_BUDGET):
            out, nrmean, nrstd = pl.pallas_call(
                _bn_train_fused_kernel,
                out_shape=(jax.ShapeDtypeStruct((n, c), x.dtype), row_shape, row_shape),
                grid=(nct,),
                in_specs=[pl.BlockSpec((n, tc), lambda j: (0, j))]
                         + [pl.BlockSpec((1, tc), lambda j: (0, j))] * 4,
                out_specs=(pl.BlockSpec((n, tc), lambda j: (0, j)),
                           pl.BlockSpec((1, tc), lambda j: (0, j)),
                           pl.BlockSpec((1, tc), lambda j: (0, j))),
                compiler_params=pltpu.CompilerParams(
                    dimension_semantics=("parallel",),
                    vmem_limit_bytes=_VMEM_LIMIT),
            )(x, gain2, bias2, rmean2, rstd2)
            return out, nrmean[0], nrstd[0]

        # Fallback: two-pass streaming (stats over batch tiles, then elementwise apply).
        tn = _choose_tile_n(n, tc, itemsize)
        nbt = pl.cdiv(n, tn)
        mask_tail = (n % tn) != 0
        nrmean, nrstd, scale, shift = pl.pallas_call(
            functools.partial(_bn_train_stats_kernel, n, tn, mask_tail),
            out_shape=(row_shape,) * 4,
            grid=(nct, nbt),
            in_specs=[pl.BlockSpec((tn, tc), lambda j, i: (i, j))]
                     + [pl.BlockSpec((1, tc), lambda j, i: (0, j))] * 4,
            out_specs=(pl.BlockSpec((1, tc), lambda j, i: (0, j)),) * 4,
            scratch_shapes=[pltpu.VMEM((SUBLANE, tc), jnp.float32),
                            pltpu.VMEM((SUBLANE, tc), jnp.float32)],
            compiler_params=pltpu.CompilerParams(
                dimension_semantics=("parallel", "arbitrary"),
                vmem_limit_bytes=_VMEM_LIMIT),
        )(x, gain2, bias2, rmean2, rstd2)
        out = _apply(x, scale, shift, tn, tc)
        return out, nrmean[0], nrstd[0]

    # Eval: fold the per-channel normalization into scale/shift once (tiny O(C)
    # XLA ops), then a single elementwise streaming pass over X.
    s = gain.astype(jnp.float32) / (running_std.astype(jnp.float32) + EPS)
    scale = s.reshape(1, c)
    shift = (bias.astype(jnp.float32) - running_mean.astype(jnp.float32) * s).reshape(1, c)
    tn = _choose_tile_n(n, tc, itemsize)
    out = _apply(x, scale, shift, tn, tc)
    return out, running_mean, running_std


# ---------------------------------------------------------------------------
# Reference + tests
# ---------------------------------------------------------------------------
def _reference(x, gain, bias, rmean, rstd, train=True):
    if train:
        bmean = jnp.mean(x, axis=0)
        bstd = jnp.std(x, axis=0, ddof=1)
        out = gain * ((x - bmean) / (bstd + EPS)) + bias
        return out, 0.99 * rmean + 0.01 * bmean, 0.99 * rstd + 0.01 * bstd
    out = gain * ((x - rmean) / (rstd + EPS)) + bias
    return out, rmean, rstd


def _check(n, c, key, force_two_pass=False):
    # Parameters mirroring the module's __init__.
    gain = jnp.ones((c,), jnp.float32)
    bias = jnp.ones((c,), jnp.float32)
    rmean = jnp.zeros((c,), jnp.float32)
    rstd = jnp.ones((c,), jnp.float32)
    x = jax.random.normal(key, (n, c), dtype=jnp.float32)

    out, rm, rs = batchnorm_forward(x, gain, bias, rmean, rstd, train=True,
                                    force_two_pass=force_two_pass)
    out, rm, rs = jax.block_until_ready((out, rm, rs))
    ref_out, ref_rm, ref_rs = _reference(x, gain, bias, rmean, rstd, True)
    assert out.shape == x.shape and rm.shape == (c,) and rs.shape == (c,)
    assert jnp.allclose(out, ref_out, atol=1e-4, rtol=1e-4), "train out mismatch"
    assert jnp.allclose(rm, ref_rm, atol=1e-5, rtol=1e-4), "running mean mismatch"
    assert jnp.allclose(rs, ref_rs, atol=1e-5, rtol=1e-4), "running std mismatch"

    out_e, _, _ = batchnorm_forward(x, gain, bias, rm, rs, train=False)
    out_e = jax.block_until_ready(out_e)
    ref_e, _, _ = _reference(x, gain, bias, rm, rs, False)
    assert jnp.allclose(out_e, ref_e, atol=1e-4, rtol=1e-4), "eval out mismatch"


if __name__ == "__main__":
    key = jax.random.PRNGKey(0)
    k1, k2, k3 = jax.random.split(key, 3)

    # Module-spec shape (hidden=32, batch=8): fused single-pass train kernel,
    # full-extent lane block (C < 128 handled with no padding at all).
    _check(8, 32, k1)
    # Larger, 128-aligned C: still fused, no X padding / output slicing.
    _check(528, 384, k2)
    # Force the two-pass fallback: multi-tile batch reduction with a ragged,
    # masked last tile and ragged elementwise apply blocks.
    _check(1037, 640, k3, force_two_pass=True)

    print("KERNEL_OK")
</pallas_src>

<mosaic_0001>
module attributes {stable_mosaic.version = 11 : i64} {
  func.func @_bn_train_fused_kernel(%arg0: i32, %arg1: memref<8x32xf32, #tpu.memory_space<vmem>>, %arg2: memref<1x32xf32, #tpu.memory_space<vmem>>, %arg3: memref<1x32xf32, #tpu.memory_space<vmem>>, %arg4: memref<1x32xf32, #tpu.memory_space<vmem>>, %arg5: memref<1x32xf32, #tpu.memory_space<vmem>>, %arg6: memref<8x32xf32, #tpu.memory_space<vmem>>, %arg7: memref<1x32xf32, #tpu.memory_space<vmem>>, %arg8: memref<1x32xf32, #tpu.memory_space<vmem>>) attributes {dimension_semantics = [#tpu.dimension_semantics<parallel>], iteration_bounds = array<i64: 1>, scalar_prefetch = 0 : i64, scratch_operands = 0 : i64, tpu.core_type = #tpu.core_type<tc>, window_params = [{transform_indices = @transform_0, window_bounds = array<i64: 8, 32>}, {transform_indices = @transform_1, window_bounds = array<i64: 1, 32>}, {transform_indices = @transform_2, window_bounds = array<i64: 1, 32>}, {transform_indices = @transform_3, window_bounds = array<i64: 1, 32>}, {transform_indices = @transform_4, window_bounds = array<i64: 1, 32>}, {transform_indices = @transform_5, window_bounds = array<i64: 8, 32>}, {transform_indices = @transform_6, window_bounds = array<i64: 1, 32>}, {transform_indices = @transform_7, window_bounds = array<i64: 1, 32>}]} {
    %c0 = arith.constant 0 : index
    %c0_0 = arith.constant 0 : index
    %0 = vector.load %arg1[%c0, %c0_0] : memref<8x32xf32, #tpu.memory_space<vmem>>, vector<8x32xf32>
    %cst = arith.constant dense<0.000000e+00> : vector<32xf32>
    %1 = vector.multi_reduction <add>, %0, %cst [0] : vector<8x32xf32> to vector<32xf32>
    %2 = vector.shape_cast %1 : vector<32xf32> to vector<1x32xf32>
    %cst_1 = arith.constant 1.250000e-01 : f32
    %3 = vector.broadcast %cst_1 : f32 to vector<1x32xf32>
    %4 = arith.mulf %2, %3 : vector<1x32xf32>
    %5 = vector.broadcast %4 : vector<1x32xf32> to vector<8x32xf32>
    %6 = arith.subf %0, %5 : vector<8x32xf32>
    %7 = arith.mulf %6, %6 : vector<8x32xf32>
    %cst_2 = arith.constant dense<0.000000e+00> : vector<32xf32>
    %8 = vector.multi_reduction <add>, %7, %cst_2 [0] : vector<8x32xf32> to vector<32xf32>
    %9 = vector.shape_cast %8 : vector<32xf32> to vector<1x32xf32>
    %cst_3 = arith.constant 0.142857149 : f32
    %10 = vector.broadcast %cst_3 : f32 to vector<1x32xf32>
    %11 = arith.mulf %9, %10 : vector<1x32xf32>
    %12 = math.sqrt %11 : vector<1x32xf32>
    %c0_4 = arith.constant 0 : index
    %c0_5 = arith.constant 0 : index
    %13 = vector.load %arg2[%c0_4, %c0_5] : memref<1x32xf32, #tpu.memory_space<vmem>>, vector<1x32xf32>
    %cst_6 = arith.constant 9.99999974E-6 : f32
    %14 = vector.broadcast %cst_6 : f32 to vector<1x32xf32>
    %15 = arith.addf %12, %14 : vector<1x32xf32>
    %16 = tpu.reciprocal %15 : vector<1x32xf32> -> vector<1x32xf32>
    %17 = arith.mulf %13, %16 : vector<1x32xf32>
    %18 = vector.broadcast %17 : vector<1x32xf32> to vector<8x32xf32>
    %19 = arith.mulf %6, %18 : vector<8x32xf32>
    %c0_7 = arith.constant 0 : index
    %c0_8 = arith.constant 0 : index
    %20 = vector.load %arg3[%c0_7, %c0_8] : memref<1x32xf32, #tpu.memory_space<vmem>>, vector<1x32xf32>
    %21 = vector.broadcast %20 : vector<1x32xf32> to vector<8x32xf32>
    %22 = arith.addf %19, %21 : vector<8x32xf32>
    %c0_9 = arith.constant 0 : index
    %c0_10 = arith.constant 0 : index
    %23 = vector.load %arg6[%c0_9, %c0_10] : memref<8x32xf32, #tpu.memory_space<vmem>>, vector<8x32xf32>
    tpu.vector_store %arg6[%c0_9, %c0_10], %22 {strides = array<i32>} : memref<8x32xf32, #tpu.memory_space<vmem>>, vector<8x32xf32>,
    %c0_11 = arith.constant 0 : index
    %c0_12 = arith.constant 0 : index
    %24 = vector.load %arg4[%c0_11, %c0_12] : memref<1x32xf32, #tpu.memory_space<vmem>>, vector<1x32xf32>
    %cst_13 = arith.constant 9.900000e-01 : f32
    %25 = vector.broadcast %cst_13 : f32 to vector<1x32xf32>
    %26 = arith.mulf %25, %24 : vector<1x32xf32>
    %cst_14 = arith.constant 0.00999999977 : f32
    %27 = vector.broadcast %cst_14 : f32 to vector<1x32xf32>
    %28 = arith.mulf %27, %4 : vector<1x32xf32>
    %29 = arith.addf %26, %28 : vector<1x32xf32>
    %c0_15 = arith.constant 0 : index
    %c0_16 = arith.constant 0 : index
    %30 = vector.load %arg7[%c0_15, %c0_16] : memref<1x32xf32, #tpu.memory_space<vmem>>, vector<1x32xf32>
    tpu.vector_store %arg7[%c0_15, %c0_16], %29 {strides = array<i32>} : memref<1x32xf32, #tpu.memory_space<vmem>>, vector<1x32xf32>,
    %c0_17 = arith.constant 0 : index
    %c0_18 = arith.constant 0 : index
    %31 = vector.load %arg5[%c0_17, %c0_18] : memref<1x32xf32, #tpu.memory_space<vmem>>, vector<1x32xf32>
    %cst_19 = arith.constant 9.900000e-01 : f32
    %32 = vector.broadcast %cst_19 : f32 to vector<1x32xf32>
    %33 = arith.mulf %32, %31 : vector<1x32xf32>
    %cst_20 = arith.constant 0.00999999977 : f32
    %34 = vector.broadcast %cst_20 : f32 to vector<1x32xf32>
    %35 = arith.mulf %34, %12 : vector<1x32xf32>
    %36 = arith.addf %33, %35 : vector<1x32xf32>
    %c0_21 = arith.constant 0 : index
    %c0_22 = arith.constant 0 : index
    %37 = vector.load %arg8[%c0_21, %c0_22] : memref<1x32xf32, #tpu.memory_space<vmem>>, vector<1x32xf32>
    tpu.vector_store %arg8[%c0_21, %c0_22], %36 {strides = array<i32>} : memref<1x32xf32, #tpu.memory_space<vmem>>, vector<1x32xf32>,
    return
  }
  func.func @transform_0(%arg0: i32) -> (i32, i32) {
    %c0_i32 = arith.constant 0 : i32
    %c0_i32_0 = arith.constant 0 : i32
    return %c0_i32, %arg0 : i32, i32
  }
  func.func @transform_1(%arg0: i32) -> (i32, i32) {
    %c0_i32 = arith.constant 0 : i32
    %c0_i32_0 = arith.constant 0 : i32
    return %c0_i32, %arg0 : i32, i32
  }
  func.func @transform_2(%arg0: i32) -> (i32, i32) {
    %c0_i32 = arith.constant 0 : i32
    %c0_i32_0 = arith.constant 0 : i32
    return %c0_i32, %arg0 : i32, i32
  }
  func.func @transform_3(%arg0: i32) -> (i32, i32) {
    %c0_i32 = arith.constant 0 : i32
    %c0_i32_0 = arith.constant 0 : i32
    return %c0_i32, %arg0 : i32, i32
  }
  func.func @transform_4(%arg0: i32) -> (i32, i32) {
    %c0_i32 = arith.constant 0 : i32
    %c0_i32_0 = arith.constant 0 : i32
    return %c0_i32, %arg0 : i32, i32
  }
  func.func @transform_5(%arg0: i32) -> (i32, i32) {
    %c0_i32 = arith.constant 0 : i32
    %c0_i32_0 = arith.constant 0 : i32
    return %c0_i32, %arg0 : i32, i32
  }
  func.func @transform_6(%arg0: i32) -> (i32, i32) {
    %c0_i32 = arith.constant 0 : i32
    %c0_i32_0 = arith.constant 0 : i32
    return %c0_i32, %arg0 : i32, i32
  }
  func.func @transform_7(%arg0: i32) -> (i32, i32) {
    %c0_i32 = arith.constant 0 : i32
    %c0_i32_0 = arith.constant 0 : i32
    return %c0_i32, %arg0 : i32, i32
  }
}

</mosaic_0001>

<llo_original>
// kernel: tpu_custom_call.1
$region0: #{tpu_custom_call.1}
  #allocation0 [shape = 'u32[]', space=smem, size = 0x4, offset = 0x4, fixed_abs, tag = 'smem constant byte address 0x4 - core index']
  #allocation1 [shape = 'u32[72,128]{1,0:T(1,128)}', space=vmem, size = 0x9000, scoped, tag = 'internal scratch']
  %s0 = inlined_call_operand.hbm [shape: f32[8,32], index: 0, kind: input, shape index: {}]
  %s1 = inlined_call_operand.hbm [shape: f32[1,32], index: 1, kind: input, shape index: {}]
  %s2 = inlined_call_operand.vmem [shape: f32[1,32], index: 2, kind: input, shape index: {}]
  %s3 = inlined_call_operand.vmem [shape: f32[1,32], index: 3, kind: input, shape index: {}]
  %s4 = inlined_call_operand.vmem [shape: f32[1,32], index: 4, kind: input, shape index: {}]
  %s5 = inlined_call_operand.hbm [shape: f32[8,32], index: 5, kind: output, shape index: {0}]
  %s6 = inlined_call_operand.hbm [shape: f32[1,32], index: 6, kind: output, shape index: {1}]
  %s7 = inlined_call_operand.hbm [shape: f32[1,32], index: 7, kind: output, shape index: {2}]
  %8 = xla_tuple %s5, %s6, %s7
  %s9 = sld [smem:[#allocation0]]
  $region54: #{tpu_custom_call.1} parent=0
    _
  %s11 = ssub.s32 1, %s9
  %s12 = scalar_select 0, %s11, %s9
  $region1: #{tpu_custom_call.1} parent=0
    #allocation2 [shape = 'u8[4096]{0}', space=vmem, size = 0x1000, scoped, tag = 'input window, operand 0, single buffered']
    #allocation3 [shape = 's32[1]{0}', space=sflag, size = 0x4, scoped, tag = 'scoped memory for tpu_custom_call.1']
    #allocation4 [shape = 's32[1]{0}', space=sflag, size = 0x4, scoped, tag = 'scoped memory for tpu_custom_call.1']
    #allocation5 [shape = 'u8[512]{0}', space=vmem, size = 0x400, scoped, tag = 'input window, operand 1, single buffered']
    #allocation6 [shape = 's32[1]{0}', space=sflag, size = 0x4, scoped, tag = 'scoped memory for tpu_custom_call.1']
    #allocation7 [shape = 'u8[4096]{0}', space=vmem, size = 0x1000, scoped, tag = 'output window, operand 0, single buffered']
    #allocation8 [shape = 'u8[512]{0}', space=vmem, size = 0x400, scoped, tag = 'output window, operand 1, single buffered']
    #allocation9 [shape = 's32[1]{0}', space=sflag, size = 0x4, scoped, tag = 'scoped memory for tpu_custom_call.1']
    #allocation10 [shape = 'u8[512]{0}', space=vmem, size = 0x400, scoped, tag = 'output window, operand 2, single buffered']
    %13 = vsyncpa [#allocation3], 0
    %14 = vsyncpa [#allocation6], 0
    %15 = vsyncpa [#allocation4], 0
    %16 = vsyncpa [#allocation9], 0
    // Predicated region
    $region2: #{tpu_custom_call.1} parent=1 // pred_check
      _
    $region3: #{tpu_custom_call.1} parent=1 // pred_check_branch
      %18 = sbr.rel (0) target = $region5
    $region4: #{tpu_custom_call.1} parent=1 // pred_region
      %20 = vsyncadd [#allocation3], 0
      %s22 = sshll.u32 %s0, 4
      %s23 = int_to_ptr.hbm [resolvable:$true] %s22
      %s24 = sshll.u32 [#allocation2], 4
      %s25 = int_to_ptr.vmem [resolvable:$true] %s24
      %27 = dma.hbm_to_vmem [thread:$0]  %s23, 128, %s25, [#allocation3]
    $region5: #{tpu_custom_call.1} parent=1 // pred_fallthru
      _
    // Predicated region
    $region6: #{tpu_custom_call.1} parent=1 // pred_check
      _
    $region7: #{tpu_custom_call.1} parent=1 // pred_check_branch
      %29 = sbr.rel (0) target = $region9
    $region8: #{tpu_custom_call.1} parent=1 // pred_region
      %31 = vsyncadd [#allocation6], 0
      %s33 = sshll.u32 %s1, 4
      %s34 = int_to_ptr.hbm [resolvable:$true] %s33
      %s35 = sshll.u32 [#allocation5], 4
      %s36 = int_to_ptr.vmem [resolvable:$true] %s35
      %38 = dma.hbm_to_vmem [thread:$0]  %s34, 16, %s36, [#allocation6]
    $region9: #{tpu_custom_call.1} parent=1 // pred_fallthru
      _
    // Predicated region
    $region10: #{tpu_custom_call.1} parent=1 // pred_check
      _
    $region11: #{tpu_custom_call.1} parent=1 // pred_check_branch
      %40 = sbr.rel (0) target = $region13
    $region12: #{tpu_custom_call.1} parent=1 // pred_region
      _
    $region13: #{tpu_custom_call.1} parent=1 // pred_fallthru
      _
    // Predicated region
    $region14: #{tpu_custom_call.1} parent=1 // pred_check
      _
    $region15: #{tpu_custom_call.1} parent=1 // pred_check_branch
      %42 = sbr.rel (0) target = $region17
    $region16: #{tpu_custom_call.1} parent=1 // pred_region
      _
    $region17: #{tpu_custom_call.1} parent=1 // pred_fallthru
      _
    // Predicated region
    $region18: #{tpu_custom_call.1} parent=1 // pred_check
      _
    $region19: #{tpu_custom_call.1} parent=1 // pred_check_branch
      %44 = sbr.rel (0) target = $region21
    $region20: #{tpu_custom_call.1} parent=1 // pred_region
      _
    $region21: #{tpu_custom_call.1} parent=1 // pred_fallthru
      _
    // Predicated region
    $region22: #{tpu_custom_call.1} parent=1 // pred_check
      _
    $region23: #{tpu_custom_call.1} parent=1 // pred_check_branch
      %46 = sbr.rel (0) target = $region25
    $region24: #{tpu_custom_call.1} parent=1 // pred_region
      %48 = dma.done [#allocation3], 128
    $region25: #{tpu_custom_call.1} parent=1 // pred_fallthru
      _
    // Predicated region
    $region26: #{tpu_custom_call.1} parent=1 // pred_check
      _
    $region27: #{tpu_custom_call.1} parent=1 // pred_check_branch
      %50 = sbr.rel (0) target = $region29
    $region28: #{tpu_custom_call.1} parent=1 // pred_region
      %52 = dma.done [#allocation6], 16
    $region29: #{tpu_custom_call.1} parent=1 // pred_fallthru
      _
    %v53 = vld [vmem:[#allocation2] sm:$0xff]
    %vm54 = vcmask 261120
    %v55 = vsel %vm54, %v53, 0.0
    %v56 = vrot.slane %v55, 4
    %v57 = vadd.f32 %v55, %v56
    %v58 = vrot.slane %v57, 2
    %v59 = vadd.f32 %v57, %v58
    %v60 = vrot.slane %v59, 1
    %v61 = vadd.f32 %v59, %v60
    %v62 = vmul.f32 %v61, 0.125
    %v63 = vsub.f32 %v53, %v62
    %v64 = vmul.f32 %v63, %v63
    %v65 = vsel %vm54, %v64, 0.0
    %v66 = vrot.slane %v65, 4
    %v67 = vadd.f32 %v65, %v66
    %v68 = vrot.slane %v67, 2
    %v69 = vadd.f32 %v67, %v68
    %v70 = vrot.slane %v69, 1
    %v71 = vadd.f32 %v69, %v70
    %v72 = vmul.f32 %v71, 0.14285715
    %v73 = vrsqrt.pop %v72
    %v74 = vmul.f32 %v73, %v72
    %v75 = vmul.f32 %v74, %v73
    %v76 = vmul.f32 0.5, %v75
    %v77 = vsub.f32 1.5, %v76
    %v78 = vmul.f32 %v73, %v77
    %v79 = vmul.f32 %v72, %v78
    %vm80 = vcmp.eq.f32.partialorder %v72, inf
    %v81 = vsel %vm80, %v72, %v79
    %vm82 = vcmp.eq.f32.partialorder %v72, 0.0
    %v83 = vand.u32 %v72, 2147483648
    %v84 = vsel %vm82, %v83, %v81
    %v85 = vld [vmem:[#allocation5] sm:$0x1]
    %v86 = vadd.f32 %v84, 1e-05
    %v87 = vrcp.pop %v86
    %v88 = vmul.f32 %v86, %v87
    %v89 = vsub.f32 1.0, %v88
    %v90 = vmul.f32 %v87, %v89
    %v91 = vadd.f32 %v87, %v90
    %vm92 = vweird.f32 %v86
    %vm93 = vweird.f32 %v87
    %vm94 = vmor %vm92, %vm93
    %v95 = vsel %vm94, %v87, %v91
    %v96 = vand.u32 2147483647, %v86
    %vm97 = vcmp.eq.f32.partialorder %v96, 8.507059e+37
    %v98 = vand.u32 %v86, 2147483648
    %v99 = vor.u32 1.1754944e-38, %v98
    %v100 = vsel %vm97, %v99, %v95
    %v101 = vmul.f32 %v85, %v100
    %v103 = vperm.slane %v101, 0
    %v105 = vmul.f32 %v63, %v103
    %v106 = vld [vmem:[%s2] sm:$0x1]
    %v108 = vperm.slane %v106, 0
    %v110 = vadd.f32 %v105, %v108
    %111 = vst.msk [vmem:[#allocation7] sm:$0xff] %vm54, %v110
    %v112 = vld [vmem:[%s3] sm:$0x1]
    %v113 = vmul.f32 %v112, 0.99
    %v114 = vmul.f32 %v62, 0.01
    %v115 = vadd.f32 %v113, %v114
    %vm116 = vcmask 253952
    %117 = vst.msk [vmem:[#allocation8] sm:$0x1] %vm116, %v115
    %v118 = vld [vmem:[%s4] sm:$0x1]
    %v119 = vmul.f32 %v118, 0.99
    %v120 = vmul.f32 %v84, 0.01
    %v121 = vadd.f32 %v119, %v120
    %122 = vst.msk [vmem:[#allocation10] sm:$0x1] %vm116, %v121
    // Predicated region
    $region30: #{tpu_custom_call.1} parent=1 // pred_check
      _
    $region31: #{tpu_custom_call.1} parent=1 // pred_check_branch
      %124 = sbr.rel (0) target = $region33
    $region32: #{tpu_custom_call.1} parent=1 // pred_region
      %126 = vsyncadd [#allocation4], 0
      %s128 = sshll.u32 [#allocation7], 4
      %s129 = int_to_ptr.vmem [resolvable:$true] %s128
      %s130 = sshll.u32 %s5, 4
      %s131 = int_to_ptr.hbm [resolvable:$true] %s130
      %133 = dma.vmem_to_hbm [thread:$0]  %s129, 128, %s131, [#allocation4]
    $region33: #{tpu_custom_call.1} parent=1 // pred_fallthru
      _
    // Predicated region
    $region34: #{tpu_custom_call.1} parent=1 // pred_check
      _
    $region35: #{tpu_custom_call.1} parent=1 // pred_check_branch
      %135 = sbr.rel (0) target = $region37
    $region36: #{tpu_custom_call.1} parent=1 // pred_region
      %137 = vsyncadd [#allocation9], 0
      %s139 = sshll.u32 [#allocation8], 4
      %s140 = int_to_ptr.vmem [resolvable:$true] %s139
      %s141 = sshll.u32 %s6, 4
      %s142 = int_to_ptr.hbm [resolvable:$true] %s141
      %144 = dma.vmem_to_hbm [thread:$0]  %s140, 16, %s142, [#allocation9]
    $region37: #{tpu_custom_call.1} parent=1 // pred_fallthru
      _
    // Predicated region
    $region38: #{tpu_custom_call.1} parent=1 // pred_check
      _
    $region39: #{tpu_custom_call.1} parent=1 // pred_check_branch
      %146 = sbr.rel (0) target = $region41
    $region40: #{tpu_custom_call.1} parent=1 // pred_region
      %148 = vsyncadd [#allocation9], 0
      %s150 = sshll.u32 [#allocation10], 4
      %s151 = int_to_ptr.vmem [resolvable:$true] %s150
      %s152 = sshll.u32 %s7, 4
      %s153 = int_to_ptr.hbm [resolvable:$true] %s152
      %155 = dma.vmem_to_hbm [thread:$0]  %s151, 16, %s153, [#allocation9]
    $region41: #{tpu_custom_call.1} parent=1 // pred_fallthru
      _
    // Predicated region
    $region42: #{tpu_custom_call.1} parent=1 // pred_check
      _
    $region43: #{tpu_custom_call.1} parent=1 // pred_check_branch
      %157 = sbr.rel (0) target = $region45
    $region44: #{tpu_custom_call.1} parent=1 // pred_region
      %159 = dma.done [#allocation4], 128
    $region45: #{tpu_custom_call.1} parent=1 // pred_fallthru
      _
    // Predicated region
    $region46: #{tpu_custom_call.1} parent=1 // pred_check
      _
    $region47: #{tpu_custom_call.1} parent=1 // pred_check_branch
      %161 = sbr.rel (0) target = $region49
    $region48: #{tpu_custom_call.1} parent=1 // pred_region
      %163 = dma.done [#allocation9], 16
    $region49: #{tpu_custom_call.1} parent=1 // pred_fallthru
      _
    // Predicated region
    $region50: #{tpu_custom_call.1} parent=1 // pred_check
      _
    $region51: #{tpu_custom_call.1} parent=1 // pred_check_branch
      %165 = sbr.rel (0) target = $region53
    $region52: #{tpu_custom_call.1} parent=1 // pred_region
      %167 = dma.done [#allocation9], 16
    $region53: #{tpu_custom_call.1} parent=1 // pred_fallthru
      _
    %168 = vsyncpa [#allocation3], 1
    %169 = vsyncpa [#allocation6], 1
    %170 = vsyncpa [#allocation4], 1
    %171 = vsyncpa [#allocation9], 1

</llo_original>
